<compile_context>
chip_gen: v6e
topology: v6e:2x2x1
jax: 0.10.0
libtpu: 0.0.40
codegen_flags: <defaults>
</compile_context>

<pallas_src>
import functools

import numpy as np
import jax
import jax.numpy as jnp
from jax.experimental import pallas as pl
from jax.experimental.pallas import tpu as pltpu


_LANE = 128
_DEF_VMEM_CAPACITY = 64 << 20      # conservative: v7x has 64 MiB per TensorCore
_LANE_TILE_CAP = 4096              # max lane-tile width (elements)


@functools.lru_cache(maxsize=None)
def _build_weight(T: int) -> np.ndarray:
    """(T, T) matrix W such that r = W @ x reproduces the module's recurrence.

    Built in float64 so the folded 1/(T-i) and 1/i factors keep precision for
    large T; cast once at the call site.
    """
    U = np.triu(np.ones((T, T), dtype=np.float64))           # U[i, t] = 1 for t >= i
    counts = (T - np.arange(T, dtype=np.float64))[:, None]   # suffix window sizes
    M = U / counts                                            # row i -> suffix mean
    W = np.zeros((T, T), dtype=np.float64)
    S = np.zeros((T,), dtype=np.float64)                      # running sum of W rows
    for i in range(T):
        L = S / i if i > 0 else 0.0                           # mean of r_0..r_{i-1}
        W[i] = M[i] - L
        S = S + W[i]
    return W


def _vmem_budget_bytes() -> int:
    """Target VMEM budget for all double-buffered tiles, per generation."""
    try:
        cap = int(pltpu.get_tpu_info().vmem_capacity_bytes)
    except Exception:
        cap = _DEF_VMEM_CAPACITY
    return min(cap - (16 << 20), int(cap * 0.75))


def _pick_tm(T: int, w_itemsize: int, budget: int) -> int:
    """Prefer tm = T (W fully resident, x streamed once); tile rows otherwise."""
    if 2 * T * T * w_itemsize <= budget // 2:
        return T
    tm = 256
    while 2 * tm * T * w_itemsize > budget // 2 and tm > 8:
        tm //= 2
    return min(tm, T)


def _pick_lane_tile(full: int, T: int, tm: int, x_itemsize: int,
                    w_itemsize: int, budget: int) -> int:
    """Lane-tile width: large multiple of 128 that (when possible) divides
    `full`, constrained by the VMEM budget."""
    remaining = budget - 2 * tm * T * w_itemsize
    per_col = 2 * (T + tm) * x_itemsize          # double-buffered x + out columns
    max_by_budget = max(_LANE, (remaining // max(per_col, 1)) // _LANE * _LANE)
    cap = min(_LANE_TILE_CAP, max_by_budget)
    if full <= cap:
        return full
    if full % _LANE == 0:
        for t in range(cap // _LANE, 0, -1):
            cand = t * _LANE
            if full % cand == 0:
                return cand                       # divides `full`: no ragged tail
    return cap                                    # partial tail tile (still 128-aligned)


def _tpwmp_kernel(w_ref, x_ref, o_ref):
    # One MXU matmul per tile: (tm, T) @ (T, tc) -> (tm, tc), f32 accumulation,
    # single full-block store (unmasked when the lane dim is 128-aligned).
    o_ref[...] = jnp.dot(
        w_ref[...], x_ref[...], preferred_element_type=jnp.float32
    ).astype(o_ref.dtype)


def _run_direct(x, W, budget):
    """Primary path: C % 128 == 0.  Index (B, T, C) directly, no transposes."""
    B, T, C = x.shape
    x_item = jnp.dtype(x.dtype).itemsize
    w_item = jnp.dtype(W.dtype).itemsize

    tm = _pick_tm(T, w_item, budget)
    tc = _pick_lane_tile(C, T, tm, x_item, w_item, budget)
    grid = (B, pl.cdiv(T, tm), pl.cdiv(C, tc))

    vmem_need = 2 * (tm * T * w_item + T * tc * x_item + tm * tc * x_item)
    n_t_tiles = pl.cdiv(T, tm)
    cost = pl.CostEstimate(
        flops=int(2 * T * T * B * C),
        transcendentals=0,
        bytes_accessed=int(T * T * w_item
                           + n_t_tiles * B * T * C * x_item   # x re-streamed iff T tiled
                           + B * T * C * x_item),
    )

    return pl.pallas_call(
        _tpwmp_kernel,
        out_shape=jax.ShapeDtypeStruct((B, T, C), x.dtype),
        grid_spec=pltpu.PrefetchScalarGridSpec(
            num_scalar_prefetch=0,
            grid=grid,
            in_specs=[
                # W row-block: resident across the whole grid when tm == T.
                pl.BlockSpec((tm, T), lambda b, i, j: (i, 0)),
                # Per-batch lane-dense (T, tc) slab of x, straight from (B,T,C).
                pl.BlockSpec((pl.Squeezed(), T, tc), lambda b, i, j: (b, 0, j)),
            ],
            out_specs=pl.BlockSpec((pl.Squeezed(), tm, tc),
                                   lambda b, i, j: (b, i, j)),
        ),
        compiler_params=pltpu.CompilerParams(
            dimension_semantics=("parallel", "parallel", "parallel"),
            vmem_limit_bytes=int(vmem_need + (4 << 20)),
        ),
        cost_estimate=cost,
    )(W, x)


def _run_transposed(x, W, budget):
    """Fallback for non-lane-friendly C: pack (B*C) into the lane dimension."""
    B, T, C = x.shape
    N = B * C
    x_item = jnp.dtype(x.dtype).itemsize
    w_item = jnp.dtype(W.dtype).itemsize

    x_t = jnp.transpose(x, (1, 0, 2)).reshape(T, N)

    tm = _pick_tm(T, w_item, budget)
    tn = _pick_lane_tile(N, T, tm, x_item, w_item, budget)
    grid = (pl.cdiv(T, tm), pl.cdiv(N, tn))

    vmem_need = 2 * (tm * T * w_item + T * tn * x_item + tm * tn * x_item)
    n_t_tiles = pl.cdiv(T, tm)
    cost = pl.CostEstimate(
        flops=int(2 * T * T * N),
        transcendentals=0,
        bytes_accessed=int(T * T * w_item + (n_t_tiles + 1) * T * N * x_item),
    )

    out_t = pl.pallas_call(
        _tpwmp_kernel,
        out_shape=jax.ShapeDtypeStruct((T, N), x.dtype),
        grid_spec=pltpu.PrefetchScalarGridSpec(
            num_scalar_prefetch=0,
            grid=grid,
            in_specs=[
                pl.BlockSpec((tm, T), lambda i, j: (i, 0)),
                pl.BlockSpec((T, tn), lambda i, j: (0, j)),
            ],
            out_specs=pl.BlockSpec((tm, tn), lambda i, j: (i, j)),
        ),
        compiler_params=pltpu.CompilerParams(
            dimension_semantics=("parallel", "parallel"),
            vmem_limit_bytes=int(vmem_need + (4 << 20)),
        ),
        cost_estimate=cost,
    )(W, x_t)
    return out_t.reshape(T, B, C).transpose(1, 0, 2)


def temporal_position_wise_max_pooling(x):
    """x: (B, T, C) -> (B, T, C), matching the PyTorch module's forward."""
    B, T, C = x.shape
    # bf16 W for bf16 inputs (native MXU path, halves W footprint); f32 otherwise.
    w_dtype = jnp.bfloat16 if x.dtype == jnp.bfloat16 else jnp.float32
    W = jnp.asarray(_build_weight(T), dtype=w_dtype)
    budget = _vmem_budget_bytes()
    if C % _LANE == 0:
        return _run_direct(x, W, budget)
    return _run_transposed(x, W, budget)


def _reference(x):
    """Pure-JAX transcription of the PyTorch forward pass (for verification)."""
    B, T, C = x.shape
    results = []
    last = jnp.zeros((B, C), x.dtype)
    for i in range(T):
        pooled = jnp.mean(x[:, i:, :], axis=1) - last
        results.append(pooled)
        last = jnp.mean(jnp.stack(results, axis=1), axis=1)
    return jnp.stack(results, axis=1)


if __name__ == "__main__":
    fn = jax.jit(temporal_position_wise_max_pooling)
    key = jax.random.PRNGKey(0)
    k1, k2 = jax.random.split(key)

    # Case 1: small, non-lane-friendly C -> transposed fallback path.
    B, T, C = 2, 8, 32
    x1 = jax.random.normal(k1, (B, T, C), dtype=jnp.float32)
    out1 = jax.block_until_ready(fn(x1))
    ref1 = _reference(x1)
    assert out1.shape == (B, T, C) and out1.dtype == x1.dtype
    assert jnp.allclose(out1, ref1, atol=1e-4, rtol=1e-4), "mismatch (fallback path)"

    # Case 2: lane-friendly C (multiple of 128) -> direct no-transpose path.
    B2, T2, C2 = 2, 16, 256
    x2 = jax.random.normal(k2, (B2, T2, C2), dtype=jnp.float32)
    out2 = jax.block_until_ready(fn(x2))
    ref2 = _reference(x2)
    assert out2.shape == (B2, T2, C2) and out2.dtype == x2.dtype
    assert jnp.allclose(out2, ref2, atol=1e-4, rtol=1e-4), "mismatch (direct path)"

    print("KERNEL_OK")
</pallas_src>

<mosaic_0001>
module attributes {stable_mosaic.version = 11 : i64} {
  func.func @_tpwmp_kernel(%arg0: i32, %arg1: i32, %arg2: memref<8x8xf32, #tpu.memory_space<vmem>>, %arg3: memref<8x64xf32, #tpu.memory_space<vmem>>, %arg4: memref<8x64xf32, #tpu.memory_space<vmem>>) attributes {dimension_semantics = [#tpu.dimension_semantics<parallel>, #tpu.dimension_semantics<parallel>], iteration_bounds = array<i64: 1, 1>, scalar_prefetch = 0 : i64, scratch_operands = 0 : i64, tpu.core_type = #tpu.core_type<tc>, window_params = [{transform_indices = @transform_0, window_bounds = array<i64: 8, 8>}, {transform_indices = @transform_1, window_bounds = array<i64: 8, 64>}, {transform_indices = @transform_2, window_bounds = array<i64: 8, 64>}]} {
    %c0 = arith.constant 0 : index
    %c0_0 = arith.constant 0 : index
    %0 = vector.load %arg2[%c0, %c0_0] : memref<8x8xf32, #tpu.memory_space<vmem>>, vector<8x8xf32>
    %c0_1 = arith.constant 0 : index
    %c0_2 = arith.constant 0 : index
    %1 = vector.load %arg3[%c0_1, %c0_2] : memref<8x64xf32, #tpu.memory_space<vmem>>, vector<8x64xf32>
    %cst = arith.constant dense<0.000000e+00> : vector<8x64xf32>
    %2 = tpu.matmul %0, %1, %cst {dimension_numbers = #tpu.dot_dimension_numbers<[1], [0], [0], [1], [0, 0, 1, 1], [], []>} : vector<8x8xf32>, vector<8x64xf32>, vector<8x64xf32> -> vector<8x64xf32>
    %c0_3 = arith.constant 0 : index
    %c0_4 = arith.constant 0 : index
    %3 = vector.load %arg4[%c0_3, %c0_4] : memref<8x64xf32, #tpu.memory_space<vmem>>, vector<8x64xf32>
    tpu.vector_store %arg4[%c0_3, %c0_4], %2 {strides = array<i32>} : memref<8x64xf32, #tpu.memory_space<vmem>>, vector<8x64xf32>,
    return
  }
  func.func @transform_0(%arg0: i32, %arg1: i32) -> (i32, i32) {
    %c0_i32 = arith.constant 0 : i32
    %c0_i32_0 = arith.constant 0 : i32
    return %arg0, %c0_i32 : i32, i32
  }
  func.func @transform_1(%arg0: i32, %arg1: i32) -> (i32, i32) {
    %c0_i32 = arith.constant 0 : i32
    %c0_i32_0 = arith.constant 0 : i32
    return %c0_i32, %arg1 : i32, i32
  }
  func.func @transform_2(%arg0: i32, %arg1: i32) -> (i32, i32) {
    %c0_i32 = arith.constant 0 : i32
    return %arg0, %arg1 : i32, i32
  }
}

</mosaic_0001>

<llo_original>
// kernel: temporal_position_wise_max_pooling.1
$region0: #{temporal_position_wise_max_pooling.1}
  #allocation0 [shape = 'u32[]', space=smem, size = 0x4, offset = 0x4, fixed_abs, tag = 'smem constant byte address 0x4 - core index']
  #allocation1 [shape = 'u32[144,128]{1,0:T(1,128)}', space=vmem, size = 0x12000, scoped, tag = 'internal scratch']
  %s0 = inlined_call_operand.vmem [shape: f32[8,8], index: 0, kind: input, shape index: {}]
  %s1 = inlined_call_operand.vmem [shape: f32[8,64], index: 1, kind: input, shape index: {}]
  %s2 = inlined_call_operand.vmem [shape: f32[8,64], index: 2, kind: output, shape index: {}]
  %s3 = sld [smem:[#allocation0]]
  $region18: #{temporal_position_wise_max_pooling.1} parent=0
    _
  %s5 = ssub.s32 1, %s3
  %s6 = scalar_select 0, %s5, %s3
  // Predicated region
  $region2: #{temporal_position_wise_max_pooling.1} parent=0 // pred_check
    _
  $region3: #{temporal_position_wise_max_pooling.1} parent=0 // pred_check_branch
    %8 = sbr.rel (0) target = $region5
  $region4: #{temporal_position_wise_max_pooling.1} parent=0 // pred_region
    _
  $region5: #{temporal_position_wise_max_pooling.1} parent=0 // pred_fallthru
    _
  // Predicated region
  $region6: #{temporal_position_wise_max_pooling.1} parent=0 // pred_check
    _
  $region7: #{temporal_position_wise_max_pooling.1} parent=0 // pred_check_branch
    %10 = sbr.rel (0) target = $region9
  $region8: #{temporal_position_wise_max_pooling.1} parent=0 // pred_region
    _
  $region9: #{temporal_position_wise_max_pooling.1} parent=0 // pred_fallthru
    _
  %v11 = vld [vmem:[%s0] sm:$0xff]
  %v12 = vld [vmem:[%s1] sm:$0xff]
  %vm13 = vcmask 64512
  %v15 = vsel %vm13, %v11, 0
  %17 = vmatprep.subr.mxu0 0.0
  %18 = vmatpush1.msra.mxu0 0.0
  %19 = vmatprep.subr.mxu0 0.0
  %20 = vmatpush1.msra.mxu0 0.0
  %21 = vmatprep.subr.mxu0 0.0
  %22 = vmatpush1.msra.mxu0 0.0
  %23 = vmatprep.subr.mxu0 0.0
  %24 = vmatpush1.msra.mxu0 0.0
  %25 = vmatprep.subr.mxu0 0.0
  %26 = vmatpush1.msra.mxu0 0.0
  %27 = vmatprep.subr.mxu0 0.0
  %28 = vmatpush1.msra.mxu0 0.0
  %29 = vmatprep.subr.mxu0 0.0
  %30 = vmatpush1.msra.mxu0 0.0
  %31 = vmatprep.subr.mxu0 0.0
  %32 = vmatpush1.msra.mxu0 0.0
  %33 = vmatprep.subr.mxu0 0.0
  %34 = vmatpush1.msra.mxu0 0.0
  %35 = vmatprep.subr.mxu0 0.0
  %36 = vmatpush1.msra.mxu0 0.0
  %37 = vmatprep.subr.mxu0 0.0
  %38 = vmatpush1.msra.mxu0 0.0
  %39 = vmatprep.subr.mxu0 0.0
  %40 = vmatpush1.msra.mxu0 0.0
  %41 = vmatprep.subr.mxu0 0.0
  %42 = vmatpush1.msra.mxu0 0.0
  %43 = vmatprep.subr.mxu0 0.0
  %44 = vmatpush1.msra.mxu0 0.0
  %45 = vmatprep.subr.mxu0 0.0
  %46 = vmatpush1.msra.mxu0 0.0
  %47 = vmatprep.subr.mxu0 0.0
  %48 = vmatpush1.msra.mxu0 %v12
  %49 = vmatprep.subr.mxu0 0.0
  %50 = vmatpush2.msra.mxu0 0.0
  %51 = vmatprep.subr.mxu0 0.0
  %52 = vmatpush2.msra.mxu0 0.0
  %53 = vmatprep.subr.mxu0 0.0
  %54 = vmatpush2.msra.mxu0 0.0
  %55 = vmatprep.subr.mxu0 0.0
  %56 = vmatpush2.msra.mxu0 0.0
  %57 = vmatprep.subr.mxu0 0.0
  %58 = vmatpush2.msra.mxu0 0.0
  %59 = vmatprep.subr.mxu0 0.0
  %60 = vmatpush2.msra.mxu0 0.0
  %61 = vmatprep.subr.mxu0 0.0
  %62 = vmatpush2.msra.mxu0 0.0
  %63 = vmatprep.subr.mxu0 0.0
  %64 = vmatpush2.msra.mxu0 0.0
  %65 = vmatprep.subr.mxu0 0.0
  %66 = vmatpush2.msra.mxu0 0.0
  %67 = vmatprep.subr.mxu0 0.0
  %68 = vmatpush2.msra.mxu0 0.0
  %69 = vmatprep.subr.mxu0 0.0
  %70 = vmatpush2.msra.mxu0 0.0
  %71 = vmatprep.subr.mxu0 0.0
  %72 = vmatpush2.msra.mxu0 0.0
  %73 = vmatprep.subr.mxu0 0.0
  %74 = vmatpush2.msra.mxu0 0.0
  %75 = vmatprep.subr.mxu0 0.0
  %76 = vmatpush2.msra.mxu0 0.0
  %77 = vmatprep.subr.mxu0 0.0
  %78 = vmatpush2.msra.mxu0 0.0
  %79 = vmatprep.subr.mxu0 0.0
  %80 = vmatpush2.msra.mxu0 0.0
  %81 = vmatprep.mubr.f32.mxu0 0.0
  %82 = vmatmul.mubr.f32.gmra.mxu0 %v15
  %v83 = vpop.f32.mrf.mxu0
  %v84 = vadd.f32 0.0, %v83
  %v85 = vpop.f32.mrf.mxu0
  %86 = vdwg.mxu0
  %vm87 = vcmask 523264
  %88 = vst.msk [vmem:[%s2] sm:$0xff] %vm87, %v84
  // Predicated region
  $region10: #{temporal_position_wise_max_pooling.1} parent=0 // pred_check
    _
  $region11: #{temporal_position_wise_max_pooling.1} parent=0 // pred_check_branch
    %90 = sbr.rel (0) target = $region13
  $region12: #{temporal_position_wise_max_pooling.1} parent=0 // pred_region
    _
  $region13: #{temporal_position_wise_max_pooling.1} parent=0 // pred_fallthru
    _
  // Predicated region
  $region14: #{temporal_position_wise_max_pooling.1} parent=0 // pred_check
    _
  $region15: #{temporal_position_wise_max_pooling.1} parent=0 // pred_check_branch
    %92 = sbr.rel (0) target = $region17
  $region16: #{temporal_position_wise_max_pooling.1} parent=0 // pred_region
    _
  $region17: #{temporal_position_wise_max_pooling.1} parent=0 // pred_fallthru
    _

</llo_original>
